<compile_context>
chip_gen: v6e
topology: v6e:2x2x1
jax: 0.10.0
libtpu: 0.0.40
codegen_flags: <defaults>
</compile_context>

<pallas_src>
import math

import jax
import jax.numpy as jnp
from jax.experimental import pallas as pl
from jax.experimental.pallas import tpu as pltpu

NUM_CLASSES = 4            # B=0, E=1, C=2, O=3
CLASS_PAD = 128            # lane-padded class dim used for the MXU matmul
PACK_LANES = 8             # packed lanes: 0-3 logits, 4 pred, 5 ce, 6-7 unused
NEG_FILL = -1e30
MAX_TILE_ROWS = 2048


# ----------------------------- Pallas kernel -------------------------------
def _beco_tag_kernel(x_ref, w_ref, b_ref, aux_ref, packed_ref):
    x = x_ref[...].astype(jnp.float32)               # (TR, D)
    w = w_ref[...]                                    # (D, 128) f32 (cols >= 4 are 0)
    b = b_ref[...]                                    # (1, 128)  f32 (cols >= 4 are -1e30)

    # Linear head on the MXU, f32 accumulate.  Lanes >= 4 end up at -1e30.
    logits = jnp.dot(x, w, preferred_element_type=jnp.float32) + b   # (TR, 128)

    # All remaining reductions run on the 8-lane slice (3 XLU stages, not 7).
    logits8 = logits[:, :PACK_LANES]                                  # (TR, 8)

    aux = aux_ref[...]                                # (TR, 1) int32: label 0..3, -1 if masked
    mask = aux >= 0                                   # (TR, 1) bool
    lane8 = jax.lax.broadcasted_iota(jnp.int32, logits8.shape, 1)     # (TR, 8), reused

    # argmax over classes (lanes 4..7 hold -1e30 and never win);
    # tie-break = lowest class index, matching jnp/torch argmax.
    row_max = jnp.max(logits8, axis=-1, keepdims=True)                # (TR, 1)
    preds = jnp.min(jnp.where(logits8 == row_max, lane8, PACK_LANES),
                    axis=-1, keepdims=True)                           # (TR, 1) int32
    preds_f = jnp.where(mask, preds.astype(jnp.float32), -1.0)        # (TR, 1) f32

    # Masked per-token cross entropy (select-reduce gather, no one-hot mul).
    logit_at_label = jnp.sum(jnp.where(lane8 == aux, logits8, 0.0),
                             axis=-1, keepdims=True)                  # (TR, 1)
    lse = row_max + jnp.log(jnp.sum(jnp.exp(logits8 - row_max),
                                    axis=-1, keepdims=True))          # (TR, 1)
    ce = jnp.where(mask, lse - logit_at_label, 0.0)                   # (TR, 1)

    # Narrow packed per-row output: [logit0..3, pred, ce, 0, 0].
    packed_ref[...] = jnp.where(
        lane8 < NUM_CLASSES, logits8,
        jnp.where(lane8 == NUM_CLASSES, preds_f,
                  jnp.where(lane8 == NUM_CLASSES + 1, ce, 0.0)))


# ------------------------- tiling / VMEM planning ---------------------------
def _vmem_plan():
    """(pipeline-block budget, vmem_limit_bytes), generation-aware."""
    cap = 64 * 1024 * 1024                       # conservative fallback (v7x physical)
    try:
        info = pltpu.get_tpu_info()
        cap = int(getattr(info, "vmem_capacity_bytes", cap) or cap)
    except Exception:
        pass
    budget = min(int(cap * 0.55), 56 * 1024 * 1024)    # v5e/v6e ~56 MiB, v7x ~35 MiB
    limit = min(int(cap * 0.75), budget + (16 << 20))  # headroom for compiler scratch
    return budget, limit


def _pick_tile_rows(rows, hidden, budget):
    """Largest row tile (multiple of 8, <= MAX_TILE_ROWS) whose pipelined
    blocks + resident W/b + live f32 intermediates fit the VMEM budget, then
    clamped so the row grid has >= 2 steps (v7x has 2 TensorCores)."""
    rows_up = max(8, ((rows + 7) // 8) * 8)
    const = 2 * hidden * CLASS_PAD * 4 + 2 * CLASS_PAD * 4   # W + bias double buffers
    avail = max(budget - const, 1 << 20)
    per_row = (2 * hidden * 4            # x f32, double buffered
               + 2 * PACK_LANES * 4      # packed f32 output, double buffered
               + 2 * CLASS_PAD * 4       # aux int32 (lane-padded layout), double buffered
               + 3 * CLASS_PAD * 4)      # live (rows, 128) f32 intermediates
    fit = max(8, (avail // per_row) // 8 * 8)
    tile = int(min(MAX_TILE_ROWS, fit, rows_up))
    if rows_up >= 16 and tile >= rows_up:
        tile = ((rows_up // 2 + 7) // 8) * 8     # guarantees >= 2 grid steps
    return tile


# --------------------------------- wrapper ----------------------------------
def beco_tag_head(token_reps, token_masks, token_labels, weight_t, bias):
    """Fused tag-head: logits, masked argmax preds, masked mean token CE.

    token_reps: (B, T, D) float
    token_masks: (B, T) bool
    token_labels: (B, T) int32 (BECO labels in {0,1,2,3})
    weight_t: (D, 4) float  (transpose of nn.Linear weight)
    bias: (4,) float
    """
    B, T, D = token_reps.shape
    R = B * T
    budget, vmem_limit = _vmem_plan()
    tile_rows = _pick_tile_rows(R, D, budget)
    num_tiles = -(-R // tile_rows)        # cdiv

    # No cast / pad HBM pass: reshape is free, dtype handled in-kernel,
    # ragged last tile handled by Pallas block clipping + aux masking.
    x = token_reps.reshape(R, D)

    # Single narrow per-row aux input: label where valid, -1 where masked.
    aux = jnp.where(token_masks.reshape(R),
                    token_labels.reshape(R).astype(jnp.int32), -1).reshape(R, 1)

    w_pad = jnp.zeros((D, CLASS_PAD), jnp.float32)
    w_pad = w_pad.at[:, :NUM_CLASSES].set(weight_t.astype(jnp.float32))
    b_pad = jnp.full((1, CLASS_PAD), NEG_FILL, jnp.float32)
    b_pad = b_pad.at[0, :NUM_CLASSES].set(bias.astype(jnp.float32))

    packed = pl.pallas_call(
        _beco_tag_kernel,
        out_shape=jax.ShapeDtypeStruct((R, PACK_LANES), jnp.float32),
        grid=(num_tiles,),
        in_specs=[
            pl.BlockSpec((tile_rows, D), lambda i: (i, 0)),       # x   (native dtype)
            pl.BlockSpec((D, CLASS_PAD), lambda i: (0, 0)),       # W   (f32, resident)
            pl.BlockSpec((1, CLASS_PAD), lambda i: (0, 0)),       # b   (f32, resident)
            pl.BlockSpec((tile_rows, 1), lambda i: (i, 0)),       # aux (int32)
        ],
        out_specs=pl.BlockSpec((tile_rows, PACK_LANES), lambda i: (i, 0)),
        compiler_params=pltpu.CompilerParams(
            dimension_semantics=("parallel",),
            vmem_limit_bytes=vmem_limit),
    )(x, w_pad, b_pad, aux)

    token_logits = packed[:, :NUM_CLASSES].reshape(B, T, NUM_CLASSES)
    token_preds = packed[:, NUM_CLASSES].astype(jnp.int32).reshape(B, T)
    ce_sum = jnp.sum(packed[:, NUM_CLASSES + 1])
    n_valid = jnp.sum(token_masks.astype(jnp.float32))
    # NOTE: torch cross_entropy(reduction='mean') yields NaN when n_valid == 0;
    # we clamp the denominator to 1 instead (benign semantic divergence).
    tagger_loss = ce_sum / jnp.maximum(n_valid, 1.0)
    return token_logits, token_preds, tagger_loss


# ----------------------------- plain-JAX glue -------------------------------
def make_token_labels(token_masks, span_ids, span_masks, span_labels):
    """Vectorized equivalent of BECOTagger.make_token_labels (static shapes)."""
    B_class, E_class, C_class, O_class = 0, 1, 2, 3
    B, T = token_masks.shape
    pos = (span_labels > 0) & span_masks                        # (B, S)
    starts = span_ids[..., 0]                                   # (B, S)
    ends_m1 = span_ids[..., 1] - 1                              # (B, S)
    tok = jnp.arange(T)[None, :, None]                          # (1, T, 1)
    is_B = jnp.any(pos[:, None, :] & (starts[:, None, :] == tok), axis=-1)
    is_E = jnp.any(pos[:, None, :] & (ends_m1[:, None, :] == tok), axis=-1)
    labels = jnp.where(is_B & is_E, C_class,
                       jnp.where(is_E, E_class,
                                 jnp.where(is_B, B_class, O_class)))
    return jnp.where(token_masks, labels, O_class).astype(jnp.int32)


def init_params(key, input_size):
    """Deterministic init matching BECOTagger.init_weights (xavier_uniform, 0 bias)."""
    bound = math.sqrt(6.0 / (input_size + NUM_CLASSES))
    w = jax.random.uniform(key, (NUM_CLASSES, input_size),
                           minval=-bound, maxval=bound, dtype=jnp.float32)
    b = jnp.zeros((NUM_CLASSES,), jnp.float32)
    return w, b


def beco_tagger_forward(params, token_reps, token_masks, span_ids, span_masks,
                        span_labels=None):
    w, b = params                                   # w: (4, D), b: (4,)
    if span_labels is not None:
        token_labels = make_token_labels(token_masks, span_ids, span_masks,
                                         span_labels)
    else:
        token_labels = jnp.full(token_masks.shape, 3, dtype=jnp.int32)
    token_logits, token_preds, loss = beco_tag_head(
        token_reps, token_masks, token_labels, w.T, b)
    tagger_loss = loss if span_labels is not None else jnp.float32(0.0)
    # TODO(synk): span extraction (extract_span_ids) omitted — dynamic shapes.
    return dict(token_logits=token_logits, token_preds=token_preds,
                tagger_loss=tagger_loss, token_labels=token_labels)


# --------------------------------- main -------------------------------------
if __name__ == "__main__":
    key = jax.random.PRNGKey(0)
    k_w, k_x, k_s, k_l = jax.random.split(key, 4)

    B, T, D, S = 2, 16, 32, 6
    params = init_params(k_w, D)

    token_reps = jax.random.normal(k_x, (B, T, D), dtype=jnp.float32)
    token_masks = jnp.arange(T)[None, :] < jnp.array([[13], [16]])   # (B, T) bool

    starts = jax.random.randint(k_s, (B, S), 0, T - 3)
    widths = jax.random.randint(k_l, (B, S), 1, 4)
    span_ids = jnp.stack([starts, starts + widths], axis=-1)          # (B, S, 2)
    span_masks = jnp.ones((B, S), dtype=bool).at[:, -1].set(False)
    span_labels = (jnp.arange(S)[None, :] % 3).astype(jnp.int32) * jnp.ones(
        (B, 1), jnp.int32)

    out = beco_tagger_forward(params, token_reps, token_masks, span_ids,
                              span_masks, span_labels)
    jax.block_until_ready(out)

    # --- reference checks ----------------------------------------------------
    w, b = params

    # (a) Matmul plumbing vs a plain-XLA f32 head (loose tol: the in-kernel and
    #     XLA default MXU precisions may differ at the bf16-pass level).
    ref_logits = jnp.einsum("btd,cd->btc", token_reps, w) + b
    assert jnp.allclose(out["token_logits"], ref_logits, atol=5e-2, rtol=2e-2)

    # (b) argmax / mask / CE logic, checked exactly against the kernel's own logits.
    kl = out["token_logits"]
    ref_preds = jnp.where(token_masks, jnp.argmax(kl, axis=-1), -1)
    assert jnp.array_equal(out["token_preds"], ref_preds)

    labels = out["token_labels"]
    lse = jax.nn.logsumexp(kl, axis=-1)
    gathered = jnp.take_along_axis(kl, labels[..., None], axis=-1)[..., 0]
    ref_loss = jnp.sum(jnp.where(token_masks, lse - gathered, 0.0)) / jnp.sum(
        token_masks)
    assert jnp.allclose(out["tagger_loss"], ref_loss, atol=1e-4, rtol=1e-4)

    print("KERNEL_OK")
</pallas_src>

<mosaic_0001>
module attributes {stable_mosaic.version = 11 : i64} {
  func.func @_beco_tag_kernel(%arg0: i32, %arg1: memref<16x32xf32, #tpu.memory_space<vmem>>, %arg2: memref<32x128xf32, #tpu.memory_space<vmem>>, %arg3: memref<1x128xf32, #tpu.memory_space<vmem>>, %arg4: memref<16x1xi32, #tpu.memory_space<vmem>>, %arg5: memref<16x8xf32, #tpu.memory_space<vmem>>) attributes {dimension_semantics = [#tpu.dimension_semantics<parallel>], iteration_bounds = array<i64: 2>, scalar_prefetch = 0 : i64, scratch_operands = 0 : i64, tpu.core_type = #tpu.core_type<tc>, window_params = [{transform_indices = @transform_0, window_bounds = array<i64: 16, 32>}, {pipeline_mode = #tpu.pipeline_mode<synchronous>, transform_indices = @transform_1, window_bounds = array<i64: 32, 128>}, {pipeline_mode = #tpu.pipeline_mode<synchronous>, transform_indices = @transform_2, window_bounds = array<i64: 1, 128>}, {transform_indices = @transform_3, window_bounds = array<i64: 16, 1>}, {transform_indices = @transform_4, window_bounds = array<i64: 16, 8>}]} {
    %c0 = arith.constant 0 : index
    %c0_0 = arith.constant 0 : index
    %0 = vector.load %arg1[%c0, %c0_0] : memref<16x32xf32, #tpu.memory_space<vmem>>, vector<16x32xf32>
    %c0_1 = arith.constant 0 : index
    %c0_2 = arith.constant 0 : index
    %1 = vector.load %arg2[%c0_1, %c0_2] : memref<32x128xf32, #tpu.memory_space<vmem>>, vector<32x128xf32>
    %c0_3 = arith.constant 0 : index
    %c0_4 = arith.constant 0 : index
    %2 = vector.load %arg3[%c0_3, %c0_4] : memref<1x128xf32, #tpu.memory_space<vmem>>, vector<1x128xf32>
    %cst = arith.constant dense<0.000000e+00> : vector<16x128xf32>
    %3 = tpu.matmul %0, %1, %cst {dimension_numbers = #tpu.dot_dimension_numbers<[1], [0], [0], [1], [0, 0, 1, 1], [], []>} : vector<16x32xf32>, vector<32x128xf32>, vector<16x128xf32> -> vector<16x128xf32>
    %4 = vector.broadcast %2 : vector<1x128xf32> to vector<16x128xf32>
    %5 = arith.addf %3, %4 : vector<16x128xf32>
    %6 = vector.extract_strided_slice %5 {offsets = [0, 0], sizes = [16, 8], strides = [1, 1]} : vector<16x128xf32> to vector<16x8xf32>
    %c0_5 = arith.constant 0 : index
    %c0_6 = arith.constant 0 : index
    %7 = vector.load %arg4[%c0_5, %c0_6] : memref<16x1xi32, #tpu.memory_space<vmem>>, vector<16x1xi32>
    %c0_i32 = arith.constant 0 : i32
    %8 = vector.broadcast %c0_i32 : i32 to vector<16x1xi32>
    %9 = arith.cmpi sge, %7, %8 : vector<16x1xi32>
    %10 = tpu.iota {dimensions = array<i32: 1>} : vector<16x8xi32>
    %cst_7 = arith.constant dense<0xFF800000> : vector<16xf32>
    %11 = vector.multi_reduction <maximumf>, %6, %cst_7 [1] : vector<16x8xf32> to vector<16xf32>
    %12 = vector.shape_cast %11 : vector<16xf32> to vector<16x1xf32>
    %13 = vector.broadcast %12 : vector<16x1xf32> to vector<16x8xf32>
    %14 = arith.cmpf oeq, %6, %13 : vector<16x8xf32>
    %c8_i32 = arith.constant 8 : i32
    %15 = vector.broadcast %c8_i32 : i32 to vector<16x8xi32>
    %16 = arith.select %14, %10, %15 : vector<16x8xi1>, vector<16x8xi32>
    %cst_8 = arith.constant dense<2147483647> : vector<16xi32>
    %17 = vector.multi_reduction <minsi>, %16, %cst_8 [1] : vector<16x8xi32> to vector<16xi32>
    %18 = vector.shape_cast %17 : vector<16xi32> to vector<16x1xi32>
    %19 = arith.sitofp %18 : vector<16x1xi32> to vector<16x1xf32>
    %cst_9 = arith.constant -1.000000e+00 : f32
    %20 = vector.broadcast %cst_9 : f32 to vector<16x1xf32>
    %21 = arith.select %9, %19, %20 : vector<16x1xi1>, vector<16x1xf32>
    %22 = vector.broadcast %7 : vector<16x1xi32> to vector<16x8xi32>
    %23 = arith.cmpi eq, %10, %22 : vector<16x8xi32>
    %cst_10 = arith.constant 0.000000e+00 : f32
    %24 = vector.broadcast %cst_10 : f32 to vector<16x8xf32>
    %25 = arith.select %23, %6, %24 : vector<16x8xi1>, vector<16x8xf32>
    %cst_11 = arith.constant dense<0.000000e+00> : vector<16xf32>
    %26 = vector.multi_reduction <add>, %25, %cst_11 [1] : vector<16x8xf32> to vector<16xf32>
    %27 = vector.shape_cast %26 : vector<16xf32> to vector<16x1xf32>
    %28 = vector.broadcast %12 : vector<16x1xf32> to vector<16x8xf32>
    %29 = arith.subf %6, %28 : vector<16x8xf32>
    %30 = math.exp %29 : vector<16x8xf32>
    %cst_12 = arith.constant dense<0.000000e+00> : vector<16xf32>
    %31 = vector.multi_reduction <add>, %30, %cst_12 [1] : vector<16x8xf32> to vector<16xf32>
    %32 = vector.shape_cast %31 : vector<16xf32> to vector<16x1xf32>
    %33 = math.log %32 : vector<16x1xf32>
    %34 = arith.addf %12, %33 : vector<16x1xf32>
    %35 = arith.subf %34, %27 : vector<16x1xf32>
    %cst_13 = arith.constant 0.000000e+00 : f32
    %36 = vector.broadcast %cst_13 : f32 to vector<16x1xf32>
    %37 = arith.select %9, %35, %36 : vector<16x1xi1>, vector<16x1xf32>
    %c4_i32 = arith.constant 4 : i32
    %38 = vector.broadcast %c4_i32 : i32 to vector<16x8xi32>
    %39 = arith.cmpi slt, %10, %38 : vector<16x8xi32>
    %c4_i32_14 = arith.constant 4 : i32
    %40 = vector.broadcast %c4_i32_14 : i32 to vector<16x8xi32>
    %41 = arith.cmpi eq, %10, %40 : vector<16x8xi32>
    %c5_i32 = arith.constant 5 : i32
    %42 = vector.broadcast %c5_i32 : i32 to vector<16x8xi32>
    %43 = arith.cmpi eq, %10, %42 : vector<16x8xi32>
    %cst_15 = arith.constant 0.000000e+00 : f32
    %44 = vector.shape_cast %37 : vector<16x1xf32> to vector<16x1xf32>
    %45 = vector.broadcast %44 : vector<16x1xf32> to vector<16x8xf32>
    %46 = vector.broadcast %cst_15 : f32 to vector<16x8xf32>
    %47 = arith.select %43, %45, %46 : vector<16x8xi1>, vector<16x8xf32>
    %48 = vector.shape_cast %21 : vector<16x1xf32> to vector<16x1xf32>
    %49 = vector.broadcast %48 : vector<16x1xf32> to vector<16x8xf32>
    %50 = arith.select %41, %49, %47 : vector<16x8xi1>, vector<16x8xf32>
    %51 = arith.select %39, %6, %50 : vector<16x8xi1>, vector<16x8xf32>
    %c0_16 = arith.constant 0 : index
    %c0_17 = arith.constant 0 : index
    %52 = vector.load %arg5[%c0_16, %c0_17] : memref<16x8xf32, #tpu.memory_space<vmem>>, vector<16x8xf32>
    tpu.vector_store %arg5[%c0_16, %c0_17], %51 {strides = array<i32>} : memref<16x8xf32, #tpu.memory_space<vmem>>, vector<16x8xf32>,
    return
  }
  func.func @transform_0(%arg0: i32) -> (i32, i32) {
    %c0_i32 = arith.constant 0 : i32
    %c0_i32_0 = arith.constant 0 : i32
    return %arg0, %c0_i32 : i32, i32
  }
  func.func @transform_1(%arg0: i32) -> (i32, i32) {
    %c0_i32 = arith.constant 0 : i32
    %c0_i32_0 = arith.constant 0 : i32
    %c0_i32_1 = arith.constant 0 : i32
    return %c0_i32, %c0_i32_0 : i32, i32
  }
  func.func @transform_2(%arg0: i32) -> (i32, i32) {
    %c0_i32 = arith.constant 0 : i32
    %c0_i32_0 = arith.constant 0 : i32
    %c0_i32_1 = arith.constant 0 : i32
    return %c0_i32, %c0_i32_0 : i32, i32
  }
  func.func @transform_3(%arg0: i32) -> (i32, i32) {
    %c0_i32 = arith.constant 0 : i32
    %c0_i32_0 = arith.constant 0 : i32
    return %arg0, %c0_i32 : i32, i32
  }
  func.func @transform_4(%arg0: i32) -> (i32, i32) {
    %c0_i32 = arith.constant 0 : i32
    %c0_i32_0 = arith.constant 0 : i32
    return %arg0, %c0_i32 : i32, i32
  }
}

</mosaic_0001>

<llo_original>
// kernel: tpu_custom_call.1
$region0: #{tpu_custom_call.1}
  #allocation0 [shape = 'u32[]', space=smem, size = 0x4, offset = 0x4, fixed_abs, tag = 'smem constant byte address 0x4 - core index']
  #allocation1 [shape = 'u32[144,128]{1,0:T(1,128)}', space=vmem, size = 0x12000, scoped, tag = 'internal scratch']
  %s0 = inlined_call_operand.vmem [shape: f32[32,32], index: 0, kind: input, shape index: {}]
  %s1 = inlined_call_operand.hbm [shape: f32[32,128], index: 1, kind: input, shape index: {}]
  %s2 = inlined_call_operand.vmem [shape: f32[1,128], index: 2, kind: input, shape index: {}]
  %s3 = inlined_call_operand.vmem [shape: s32[32,1], index: 3, kind: input, shape index: {}]
  %s4 = inlined_call_operand.vmem [shape: f32[32,8], index: 4, kind: output, shape index: {}]
  %s5 = sld [smem:[#allocation0]]
  $region53: #{tpu_custom_call.1} parent=0
    _
  %s7 = ssub.s32 1, %s5
  %s8 = scalar_select 0, %s7, %s5
  $region1: #{tpu_custom_call.1} parent=0
    #allocation2 [shape = 'u8[16384]{0}', space=vmem, size = 0x4000, scoped, tag = 'input window, operand 1, single buffered']
    #allocation3 [shape = 's32[2]{0}', space=sflag, size = 0x8, scoped, tag = 'scoped memory for tpu_custom_call.1']
    %9 = vsyncpa [#allocation3], 0
    loop: start=0, step=1, limit=4
    $region2: #{tpu_custom_call.1} parent=1 // loop_pre_header
      _
    $region3: #{tpu_custom_call.1} parent=1 // loop_header
      %s11 = sphi 0, %s15
      %p12 = scmp.ge.s32.totalorder %s11, 4
      %s21 = sphi 0, %s23
      %s24 = sphi 0, %s21
      %s25 = sphi 0, %s24
      %s41 = sphi 0, %s25
      %s45 = sphi 0, %s45
      %s47 = sphi 0, %s45
      %s48 = sphi 0, %s47
      %s62 = sphi 0, %s48
      %s66 = sphi 0, %s66
      %s68 = sphi 0, %s66
      %s69 = sphi 0, %s68
      %s83 = sphi 0, %s69
      %s89 = sphi 0, %s91
      %s92 = sphi 0, %s89
      %s93 = sphi 0, %s92
      %s109 = sphi 0, %s93
      %s115 = sphi 0, %s117
      %s118 = sphi 0, %s115
      %s119 = sphi 0, %s118
      %s135 = sphi 0, %s119
    $region4: #{tpu_custom_call.1} parent=1 // loop_header_branch
      %14 = sbr.rel (%p12) target = $region8
    $region5: #{tpu_custom_call.1} parent=1 // loop_body
      %s16 = ssub.s32 %s11, 1
      %s17 = ssub.s32 %s11, 2
      %s18 = sadd.s32 %s11, 1
      %s19 = ssub.s32 %s11, %s18
      %p20 = scmp.eq.s32.totalorder %s19, 0
      %s22 = sadd.s32 %s21, 1
      %s23 = scalar_select %p20, %s21, %s22
      %p26 = pneg %p20
      %p27 = scmp.eq.s32.totalorder %s11, 1
      %p28 = por %p26, %p27
      %p29 = scmp.ne.s32.totalorder %s21, %s24
      %p30 = scmp.eq.s32.totalorder %s11, 0
      %p31 = por %p29, %p30
      %p32 = scmp.ne.s32.totalorder %s21, %s24
      %p33 = scmp.eq.s32.totalorder %s16, 1
      %p34 = por %p32, %p33
      %p35 = scmp.ne.s32.totalorder %s24, %s25
      %p36 = scmp.eq.s32.totalorder %s16, 0
      %p37 = por %p35, %p36
      %p38 = scmp.ne.s32.totalorder %s24, %s25
      %p39 = scmp.eq.s32.totalorder %s17, 1
      %p40 = por %p38, %p39
      %p42 = scmp.ne.s32.totalorder %s25, %s41
      %p43 = scmp.eq.s32.totalorder %s17, 0
      %p44 = por %p42, %p43
      %s46 = sadd.s32 %s45, 1
      %p49 = scmp.eq.s32.totalorder %s11, 1
      %p50 = scmp.ne.s32.totalorder %s45, %s47
      %p51 = scmp.eq.s32.totalorder %s11, 0
      %p52 = por %p50, %p51
      %p53 = scmp.ne.s32.totalorder %s45, %s47
      %p54 = scmp.eq.s32.totalorder %s16, 1
      %p55 = por %p53, %p54
      %p56 = scmp.ne.s32.totalorder %s47, %s48
      %p57 = scmp.eq.s32.totalorder %s16, 0
      %p58 = por %p56, %p57
      %p59 = scmp.ne.s32.totalorder %s47, %s48
      %p60 = scmp.eq.s32.totalorder %s17, 1
      %p61 = por %p59, %p60
      %p63 = scmp.ne.s32.totalorder %s48, %s62
      %p64 = scmp.eq.s32.totalorder %s17, 0
      %p65 = por %p63, %p64
      %s67 = sadd.s32 %s66, 1
      %p70 = scmp.eq.s32.totalorder %s11, 1
      %p71 = scmp.ne.s32.totalorder %s66, %s68
      %p72 = scmp.eq.s32.totalorder %s11, 0
      %p73 = por %p71, %p72
      %p74 = scmp.ne.s32.totalorder %s66, %s68
      %p75 = scmp.eq.s32.totalorder %s16, 1
      %p76 = por %p74, %p75
      %p77 = scmp.ne.s32.totalorder %s68, %s69
      %p78 = scmp.eq.s32.totalorder %s16, 0
      %p79 = por %p77, %p78
      %p80 = scmp.ne.s32.totalorder %s68, %s69
      %p81 = scmp.eq.s32.totalorder %s17, 1
      %p82 = por %p80, %p81
      %p84 = scmp.ne.s32.totalorder %s69, %s83
      %p85 = scmp.eq.s32.totalorder %s17, 0
      %p86 = por %p84, %p85
      %s87 = ssub.s32 %s11, %s18
      %p88 = scmp.eq.s32.totalorder %s87, 0
      %s90 = sadd.s32 %s89, 1
      %s91 = scalar_select %p88, %s89, %s90
      %p94 = pneg %p88
      %p95 = scmp.eq.s32.totalorder %s11, 1
      %p96 = por %p94, %p95
      %p97 = scmp.ne.s32.totalorder %s89, %s92
      %p98 = scmp.eq.s32.totalorder %s11, 0
      %p99 = por %p97, %p98
      %p100 = scmp.ne.s32.totalorder %s89, %s92
      %p101 = scmp.eq.s32.totalorder %s16, 1
      %p102 = por %p100, %p101
      %p103 = scmp.ne.s32.totalorder %s92, %s93
      %p104 = scmp.eq.s32.totalorder %s16, 0
      %p105 = por %p103, %p104
      %p106 = scmp.ne.s32.totalorder %s92, %s93
      %p107 = scmp.eq.s32.totalorder %s17, 1
      %p108 = por %p106, %p107
      %p110 = scmp.ne.s32.totalorder %s93, %s109
      %p111 = scmp.eq.s32.totalorder %s17, 0
      %p112 = por %p110, %p111
      %s113 = ssub.s32 %s11, %s18
      %p114 = scmp.eq.s32.totalorder %s113, 0
      %s116 = sadd.s32 %s115, 1
      %s117 = scalar_select %p114, %s115, %s116
      %p120 = pneg %p114
      %p121 = scmp.eq.s32.totalorder %s11, 1
      %p122 = por %p120, %p121
      %p123 = scmp.ne.s32.totalorder %s115, %s118
      %p124 = scmp.eq.s32.totalorder %s11, 0
      %p125 = por %p123, %p124
      %p126 = scmp.ne.s32.totalorder %s115, %s118
      %p127 = scmp.eq.s32.totalorder %s16, 1
      %p128 = por %p126, %p127
      %p129 = scmp.ne.s32.totalorder %s118, %s119
      %p130 = scmp.eq.s32.totalorder %s16, 0
      %p131 = por %p129, %p130
      %p132 = scmp.ne.s32.totalorder %s118, %s119
      %p133 = scmp.eq.s32.totalorder %s17, 1
      %p134 = por %p132, %p133
      %p136 = scmp.ne.s32.totalorder %s119, %s135
      %p137 = scmp.eq.s32.totalorder %s17, 0
      %p138 = por %p136, %p137
      %p139 = scmp.le.s32.totalorder 1, %s11
      %p140 = scmp.lt.s32.totalorder %s11, 3
      %p141 = pnand %p139, %p140
      %p142 = pneg %p141
      // Predicated region
      $region9: #{tpu_custom_call.1} parent=5 // pred_check
        _
      $region10: #{tpu_custom_call.1} parent=5 // pred_check_branch
        %144 = sbr.rel (%p141) target = $region12
      $region11: #{tpu_custom_call.1} parent=5 // pred_region
        %s145 = ssub.s32 %s11, 1
        // Predicated region
        $region13: #{tpu_custom_call.1} parent=11 // pred_check
          %p146 = pneg %p58
        $region14: #{tpu_custom_call.1} parent=11 // pred_check_branch
          %148 = sbr.rel (%p146) target = $region16
        $region15: #{tpu_custom_call.1} parent=11 // pred_region
          %s150 = ssub.s32 512, 512
          %151 = vsyncadd [#allocation3], %s150
          %s152 = sshll.u32 [#allocation2], 4
          %s153 = int_to_ptr.vmem [resolvable:$true] %s152
          %158 = dma.hbm_to_vmem [thread:$0]  %s1, 512, %s153, [#allocation3], 128, 128, 8
        $region16: #{tpu_custom_call.1} parent=11 // pred_fallthru
          _
        // Predicated region
        $region17: #{tpu_custom_call.1} parent=11 // pred_check
          %p159 = pneg %p79
        $region18: #{tpu_custom_call.1} parent=11 // pred_check_branch
          %161 = sbr.rel (%p159) target = $region20
        $region19: #{tpu_custom_call.1} parent=11 // pred_region
          _
        $region20: #{tpu_custom_call.1} parent=11 // pred_fallthru
          _
      $region12: #{tpu_custom_call.1} parent=5 // pred_fallthru
        _
      %p162 = scmp.lt.s32.totalorder %s11, 2
      // Predicated region
      $region21: #{tpu_custom_call.1} parent=5 // pred_check
        %p163 = pneg %p162
      $region22: #{tpu_custom_call.1} parent=5 // pred_check_branch
        %165 = sbr.rel (%p163) target = $region24
      $region23: #{tpu_custom_call.1} parent=5 // pred_region
        // Predicated region
        $region25: #{tpu_custom_call.1} parent=23 // pred_check
          %p166 = pneg %p31
        $region26: #{tpu_custom_call.1} parent=23 // pred_check_branch
          %168 = sbr.rel (%p166) target = $region28
        $region27: #{tpu_custom_call.1} parent=23 // pred_region
          %s169 = smul.u32 2, %s11
          %p170 = scmp.lt.s32.totalorder %s169, 3
          %s171 = scalar_select %p170, %s169, 3
          %s172 = smul.addr %s171, 8
          %s173 = scalar_lea.vmem %s0, %s172
          %s174 = smul.u32 2, %s11
        $region28: #{tpu_custom_call.1} parent=23 // pred_fallthru
          _
        // Predicated region
        $region29: #{tpu_custom_call.1} parent=23 // pred_check
          %p175 = pneg %p99
        $region30: #{tpu_custom_call.1} parent=23 // pred_check_branch
          %177 = sbr.rel (%p175) target = $region32
        $region31: #{tpu_custom_call.1} parent=23 // pred_region
          %s178 = smul.u32 2, %s11
          %p179 = scmp.lt.s32.totalorder %s178, 3
          %s180 = scalar_select %p179, %s178, 3
          %s181 = smul.addr %s180, 8
          %s182 = scalar_lea.vmem %s3, %s181
          %s183 = smul.u32 2, %s11
        $region32: #{tpu_custom_call.1} parent=23 // pred_fallthru
          _
      $region24: #{tpu_custom_call.1} parent=5 // pred_fallthru
        _
      %p184 = scmp.le.s32.totalorder 1, %s11
      %p185 = scmp.lt.s32.totalorder %s11, 3
      %p186 = pnand %p184, %p185
      %p187 = pneg %p186
      // Predicated region
      $region33: #{tpu_custom_call.1} parent=5 // pred_check
        _
      $region34: #{tpu_custom_call.1} parent=5 // pred_check_branch
        %189 = sbr.rel (%p186) target = $region36
      $region35: #{tpu_custom_call.1} parent=5 // pred_region
        %s190 = ssub.s32 %s11, 1
        // Predicated region
        $region37: #{tpu_custom_call.1} parent=35 // pred_check
          %p191 = pneg %p58
        $region38: #{tpu_custom_call.1} parent=35 // pred_check_branch
          %193 = sbr.rel (%p191) target = $region40
        $region39: #{tpu_custom_call.1} parent=35 // pred_region
          %194 = dma.done [#allocation3], 512
        $region40: #{tpu_custom_call.1} parent=35 // pred_fallthru
          _
        %s195 = smul.u32 2, %s16
        %p196 = scmp.lt.s32.totalorder %s195, 3
        %s197 = scalar_select %p196, %s195, 3
        %s198 = smul.addr %s197, 8
        %s199 = scalar_lea.vmem %s0, %s198
        %p200 = pneg %p37
        %p201 = pneg %p34
        %p202 = pneg %p58
        %p203 = pneg %p55
        %p204 = pneg %p79
        %p205 = pneg %p76
        %s206 = smul.u32 2, %s16
        %p207 = scmp.lt.s32.totalorder %s206, 3
        %s208 = scalar_select %p207, %s206, 3
        %s209 = smul.addr %s208, 8
        %s210 = scalar_lea.vmem %s3, %s209
        %p211 = pneg %p105
        %p212 = pneg %p102
        %p213 = pneg %p131
        %p214 = pneg %p128
        %s215 = smul.u32 2, %s16
        %p216 = scmp.lt.s32.totalorder %s215, 3
        %s217 = scalar_select %p216, %s215, 3
        %s218 = smul.addr %s217, 8
        %s219 = scalar_lea.vmem %s4, %s218
        %s220 = smul.u32 2, %s16
        %p221 = scmp.lt.s32.totalorder %s220, 3
        %s222 = scalar_select %p221, %s220, 3
        %s223 = smul.addr %s222, 8
        %s224 = scalar_lea.vmem %s0, %s223
        %s225 = smul.u32 2, %s16
        %s226 = smul.u32 2, %s16
        %p227 = scmp.lt.s32.totalorder %s226, 3
        %s228 = scalar_select %p227, %s226, 3
        %s229 = smul.addr %s228, 8
        %s230 = scalar_lea.vmem %s3, %s229
        %s231 = smul.u32 2, %s16
        %s232 = smul.u32 2, %s16
        %p233 = scmp.lt.s32.totalorder %s232, 3
        %s234 = scalar_select %p233, %s232, 3
        %s235 = smul.addr %s234, 8
        %s236 = scalar_lea.vmem %s4, %s235
        %s237 = smul.u32 2, %s16
        %v238 = vld [vmem:[%s224] sm:$0xff]
        %v239 = vld [vmem:[%s224 + $0x8] sm:$0xff]
        %v240 = vld [vmem:[#allocation2] sm:$0xff]
        %v241 = vld [vmem:[#allocation2 + $0x8] sm:$0xff]
        %v242 = vld [vmem:[#allocation2 + $0x10] sm:$0xff]
        %v243 = vld [vmem:[#allocation2 + $0x18] sm:$0xff]
        %v244 = vld [vmem:[%s2] sm:$0x1]
        %v246 = vlaneseq
        %v247 = vshrl.u32 %v246, 7
        %v248 = vsub.s32 0, %v247
        %v249 = vrot.slane %v244, %v248
        %vm251 = vcmask 261120
        %v253 = vsel %vm251, %v238, 0
        %v256 = vsel %vm251, %v239, 0
        %258 = vmatprep.subr.mxu0 0.0
        %259 = vmatpush1.msra.mxu0 0.0
        %260 = vmatprep.subr.mxu0 0.0
        %261 = vmatpush1.msra.mxu0 0.0
        %262 = vmatprep.subr.mxu0 0.0
        %263 = vmatpush1.msra.mxu0 0.0
        %264 = vmatprep.subr.mxu0 0.0
        %265 = vmatpush1.msra.mxu0 0.0
        %266 = vmatprep.subr.mxu0 0.0
        %267 = vmatpush1.msra.mxu0 0.0
        %268 = vmatprep.subr.mxu0 0.0
        %269 = vmatpush1.msra.mxu0 0.0
        %270 = vmatprep.subr.mxu0 0.0
        %271 = vmatpush1.msra.mxu0 0.0
        %272 = vmatprep.subr.mxu0 0.0
        %273 = vmatpush1.msra.mxu0 0.0
        %274 = vmatprep.subr.mxu0 0.0
        %275 = vmatpush1.msra.mxu0 0.0
        %276 = vmatprep.subr.mxu0 0.0
        %277 = vmatpush1.msra.mxu0 0.0
        %278 = vmatprep.subr.mxu0 0.0
        %279 = vmatpush1.msra.mxu0 0.0
        %280 = vmatprep.subr.mxu0 0.0
        %281 = vmatpush1.msra.mxu0 0.0
        %282 = vmatprep.subr.mxu0 0.0
        %283 = vmatpush1.msra.mxu0 %v243
        %284 = vmatprep.subr.mxu0 0.0
        %285 = vmatpush1.msra.mxu0 %v242
        %286 = vmatprep.subr.mxu0 0.0
        %287 = vmatpush1.msra.mxu0 %v241
        %288 = vmatprep.subr.mxu0 0.0
        %289 = vmatpush1.msra.mxu0 %v240
        %290 = vmatprep.subr.mxu0 0.0
        %291 = vmatpush2.msra.mxu0 0.0
        %292 = vmatprep.subr.mxu0 0.0
        %293 = vmatpush2.msra.mxu0 0.0
        %294 = vmatprep.subr.mxu0 0.0
        %295 = vmatpush2.msra.mxu0 0.0
        %296 = vmatprep.subr.mxu0 0.0
        %297 = vmatpush2.msra.mxu0 0.0
        %298 = vmatprep.subr.mxu0 0.0
        %299 = vmatpush2.msra.mxu0 0.0
        %300 = vmatprep.subr.mxu0 0.0
        %301 = vmatpush2.msra.mxu0 0.0
        %302 = vmatprep.subr.mxu0 0.0
        %303 = vmatpush2.msra.mxu0 0.0
        %304 = vmatprep.subr.mxu0 0.0
        %305 = vmatpush2.msra.mxu0 0.0
        %306 = vmatprep.subr.mxu0 0.0
        %307 = vmatpush2.msra.mxu0 0.0
        %308 = vmatprep.subr.mxu0 0.0
        %309 = vmatpush2.msra.mxu0 0.0
        %310 = vmatprep.subr.mxu0 0.0
        %311 = vmatpush2.msra.mxu0 0.0
        %312 = vmatprep.subr.mxu0 0.0
        %313 = vmatpush2.msra.mxu0 0.0
        %314 = vmatprep.subr.mxu0 0.0
        %315 = vmatpush2.msra.mxu0 0.0
        %316 = vmatprep.subr.mxu0 0.0
        %317 = vmatpush2.msra.mxu0 0.0
        %318 = vmatprep.subr.mxu0 0.0
        %319 = vmatpush2.msra.mxu0 0.0
        %320 = vmatprep.subr.mxu0 0.0
        %321 = vmatpush2.msra.mxu0 0.0
        %322 = vmatprep.mubr.f32.mxu0 0.0
        %323 = vmatmul.mubr.f32.gmra.mxu0 %v253
        %v324 = vpop.f32.mrf.mxu0
        %v325 = vadd.f32 %v249, %v324
        %v326 = vpop.f32.mrf.mxu0
        %327 = vmatprep.mubr.f32.mxu0 0.0
        %328 = vmatmul.mubr.f32.gmra.mxu0 %v256
        %v329 = vpop.f32.mrf.mxu0
        %v330 = vadd.f32 %v249, %v329
        %v331 = vpop.f32.mrf.mxu0
        %332 = vdwg.mxu0
        %v333 = vld [vmem:[%s230] sm:$0xff]
        %v334 = vld [vmem:[%s230 + $0x8] sm:$0xff]
        %vm335 = vcmp.ge.s32.totalorder %v333, 0
        %vm336 = vcmp.ge.s32.totalorder %v334, 0
        %v337 = vlaneseq
        %v338 = vand.u32 %v337, 127
        %vm339 = vcmask 64512
        %v340 = vsel %vm339, %v325, -inf
        %341 = vmax.xlane.f32.xlu0 %v340
        %v342 = vpop.xlane.xlu0 %341
        %v343 = vsel %vm339, %v330, -inf
        %344 = vmax.xlane.f32.xlu0 %v343
        %v345 = vpop.xlane.xlu0 %344
        %vm346 = vcmp.eq.f32.partialorder %v325, %v342
        %vm347 = vcmp.eq.f32.partialorder %v330, %v345
        %v348 = vsel %vm346, %v338, 8
        %v349 = vsel %vm347, %v338, 8
        %v350 = vsel %vm339, %v348, 2147483647
        %v351 = vand.u32 %v350, 65535
        %v352 = vshra.s32 %v350, 16
        %v353 = vcvt.s32.f32 %v351
        %v354 = vcvt.s32.f32 %v352
        %355 = vmin.xlane.f32.xlu0 %v354
        %v356 = vpop.xlane.xlu0 %355
        %vm357 = vcmp.eq.f32.partialorder %v354, %v356
        %v358 = vsel %vm357, %v353, inf
        %359 = vmin.xlane.f32.xlu0 %v358
        %v360 = vpop.xlane.xlu0 %359
        %v361 = vcvt.f32.s32 %v360
        %v362 = vcvt.f32.s32 %v356
        %v363 = vshll.u32 %v362, 16
        %v364 = vadd.s32 %v363, %v361
        %v365 = vsel %vm339, %v349, 2147483647
        %v366 = vand.u32 %v365, 65535
        %v367 = vshra.s32 %v365, 16
        %v368 = vcvt.s32.f32 %v366
        %v369 = vcvt.s32.f32 %v367
        %370 = vmin.xlane.f32.xlu0 %v369
        %v371 = vpop.xlane.xlu0 %370
        %vm372 = vcmp.eq.f32.partialorder %v369, %v371
        %v373 = vsel %vm372, %v368, inf
        %374 = vmin.xlane.f32.xlu0 %v373
        %v375 = vpop.xlane.xlu0 %374
        %v376 = vcvt.f32.s32 %v375
        %v377 = vcvt.f32.s32 %v371
        %v378 = vshll.u32 %v377, 16
        %v379 = vadd.s32 %v378, %v376
        %v380 = vcvt.s32.f32 %v364
        %v381 = vcvt.s32.f32 %v379
        %v382 = vsel %vm335, %v380, -1.0
        %v383 = vsel %vm336, %v381, -1.0
        %384 = vset.pattern.permute.xlu0 0
        %385 = vperm.xlu0 %384, %v333
        %v386 = vpop.permute.xlu0 %385
        %387 = vset.pattern.permute.xlu0 0
        %388 = vperm.xlu0 %387, %v334
        %v389 = vpop.permute.xlu0 %388
        %vm390 = vcmp.eq.s32.totalorder %v338, %v386
        %vm391 = vcmp.eq.s32.totalorder %v338, %v389
        %v392 = vsel %vm390, %v325, 0.0
        %v393 = vsel %vm391, %v330, 0.0
        %v394 = vsel %vm339, %v392, 0.0
        %395 = vadd.xlane.f32.xlu0 %v394
        %v396 = vpop.xlane.xlu0 %395
        %v397 = vsel %vm339, %v393, 0.0
        %398 = vadd.xlane.f32.xlu0 %v397
        %v399 = vpop.xlane.xlu0 %398
        %v400 = vsub.f32 %v325, %v342
        %v401 = vsub.f32 %v330, %v345
        %v402 = vmul.f32 %v400, 1.442695
        %v403 = vpow.pop %v402
        %v404 = vmul.f32 %v401, 1.442695
        %v405 = vpow.pop %v404
        %v406 = vsel %vm339, %v403, 0.0
        %407 = vadd.xlane.f32.xlu0 %v406
        %v408 = vpop.xlane.xlu0 %407
        %v409 = vsel %vm339, %v405, 0.0
        %410 = vadd.xlane.f32.xlu0 %v409
        %v411 = vpop.xlane.xlu0 %410
        %v412 = vlog2.pop %v408
        %v413 = vmul.f32 %v412, 0.6931472
        %v414 = vlog2.pop %v411
        %v415 = vmul.f32 %v414, 0.6931472
        %v416 = vadd.f32 %v342, %v413
        %v417 = vadd.f32 %v345, %v415
        %v418 = vsub.f32 %v416, %v396
        %v419 = vsub.f32 %v417, %v399
        %v420 = vsel %vm335, %v418, 0.0
        %v421 = vsel %vm336, %v419, 0.0
        %vm422 = vcmp.lt.s32.totalorder %v338, 4
        %vm423 = vcmp.eq.s32.totalorder %v338, 4
        %vm424 = vcmp.eq.s32.totalorder %v338, 5
        %426 = vset.pattern.permute.xlu0 0
        %427 = vperm.xlu0 %426, %v420
        %v428 = vpop.permute.xlu0 %427
        %431 = vset.pattern.permute.xlu0 0
        %432 = vperm.xlu0 %431, %v421
        %v433 = vpop.permute.xlu0 %432
        %v435 = vsel %vm424, %v428, 0.0
        %v436 = vsel %vm424, %v433, 0.0
        %438 = vset.pattern.permute.xlu0 0
        %439 = vperm.xlu0 %438, %v382
        %v440 = vpop.permute.xlu0 %439
        %443 = vset.pattern.permute.xlu0 0
        %444 = vperm.xlu0 %443, %v383
        %v445 = vpop.permute.xlu0 %444
        %v447 = vsel %vm423, %v440, %v435
        %v448 = vsel %vm423, %v445, %v436
        %v449 = vsel %vm422, %v325, %v447
        %v450 = vsel %vm422, %v330, %v448
        %451 = vst.msk [vmem:[%s236] sm:$0xff] %vm339, %v449
        %452 = vst.msk [vmem:[%s236 + $0x8] sm:$0xff] %vm339, %v450
        %s453 = smul.u32 2, %s16
        %p454 = scmp.lt.s32.totalorder %s453, 3
        %s455 = scalar_select %p454, %s453, 3
        %s456 = smul.addr %s455, 8
        %s457 = scalar_lea.vmem %s4, %s456
        // Predicated region
        $region41: #{tpu_custom_call.1} parent=35 // pred_check
          %p458 = pneg %p128
        $region42: #{tpu_custom_call.1} parent=35 // pred_check_branch
          %460 = sbr.rel (%p458) target = $region44
        $region43: #{tpu_custom_call.1} parent=35 // pred_region
          %s461 = smul.u32 2, %s16
        $region44: #{tpu_custom_call.1} parent=35 // pred_fallthru
          _
      $region36: #{tpu_custom_call.1} parent=5 // pred_fallthru
        _
      %p462 = scmp.le.s32.totalorder 2, %s11
      // Predicated region
      $region45: #{tpu_custom_call.1} parent=5 // pred_check
        %p463 = pneg %p462
      $region46: #{tpu_custom_call.1} parent=5 // pred_check_branch
        %465 = sbr.rel (%p463) target = $region48
      $region47: #{tpu_custom_call.1} parent=5 // pred_region
        %s466 = ssub.s32 %s11, 2
        // Predicated region
        $region49: #{tpu_custom_call.1} parent=47 // pred_check
          %p467 = pneg %p134
        $region50: #{tpu_custom_call.1} parent=47 // pred_check_branch
          %469 = sbr.rel (%p467) target = $region52
        $region51: #{tpu_custom_call.1} parent=47 // pred_region
          %s470 = smul.u32 2, %s17
          %p471 = scmp.lt.s32.totalorder %s470, 3
          %s472 = scalar_select %p471, %s470, 3
          %s473 = smul.addr %s472, 8
          %s474 = scalar_lea.vmem %s4, %s473
        $region52: #{tpu_custom_call.1} parent=47 // pred_fallthru
          _
      $region48: #{tpu_custom_call.1} parent=5 // pred_fallthru
        _
    $region6: #{tpu_custom_call.1} parent=1 // loop_footer
      %s15 = sadd.s32 1, %s11
    $region7: #{tpu_custom_call.1} parent=1 // loop_footer_branch
      %10 = sbr.rel target = $region3
    $region8: #{tpu_custom_call.1} parent=1 // loop_exit
      _
    %475 = vsyncpa [#allocation3], 1
    %s476 = scalar_lea.sflag [#allocation3], 1
    %477 = vsyncpa %s476, 1

</llo_original>
